<compile_context>
chip_gen: v7x
topology: tpu7x:2x2x1
jax: 0.10.0
libtpu: 0.0.40
codegen_flags: <defaults>
</compile_context>

<pallas_src>
import functools

import jax
import jax.numpy as jnp
from jax import lax
from jax.experimental import pallas as pl
from jax.experimental.pallas import tpu as pltpu


def _round_up(x, m):
    return (x + m - 1) // m * m


def _corr_mse_kernel(pred_ref, label_ref, out_ref,
                     s_neg_ref, s_pos_ref, sum_l_ref, mse_ref, hi_ref, lo_ref,
                     *, batch, n_cols):
    """Grid = (B_pad//TB [parallel], N_pad//TN [arbitrary, innermost])."""
    TB, TN = pred_ref.shape
    b = pl.program_id(0)
    n = pl.program_id(1)
    num_n = pl.num_programs(1)

    p = pred_ref[...].astype(jnp.float32)   # (TB, TN)
    l = label_ref[...].astype(jnp.float32)  # (TB, TN)

    # Column validity (handles N padding to a multiple of the lane tile).
    col = n * TN + lax.broadcasted_iota(jnp.int32, (TB, TN), 1)
    valid_lane = col < n_cols

    nz_mask = l > 0.0
    zero_mask = jnp.logical_and(l == 0.0, valid_lane)

    BIG = jnp.float32(1e30)
    t_hi = jnp.max(jnp.where(valid_lane, p, -BIG), axis=1, keepdims=True)  # (TB, 1)
    t_lo = jnp.min(jnp.where(valid_lane, p, BIG), axis=1, keepdims=True)   # (TB, 1)

    @pl.when(n == 0)
    def _init():
        s_neg_ref[...] = jnp.zeros_like(s_neg_ref)
        s_pos_ref[...] = jnp.zeros_like(s_pos_ref)
        sum_l_ref[...] = jnp.zeros_like(sum_l_ref)
        mse_ref[...] = jnp.zeros_like(mse_ref)
        hi_ref[...] = t_hi   # so that dc == 0 on the first tile
        lo_ref[...] = t_lo

    # Per-row shift c = midpoint of running [min, max]; rescale partials when it moves.
    hi_old = hi_ref[...]
    lo_old = lo_ref[...]
    c_old = 0.5 * (hi_old + lo_old)
    hi_new = jnp.maximum(hi_old, t_hi)
    lo_new = jnp.minimum(lo_old, t_lo)
    c_new = 0.5 * (hi_new + lo_new)
    dc = c_new - c_old                       # exactly 0 at n == 0

    # One fused exponential per element (each element feeds exactly one of the sums).
    z = jnp.where(nz_mask, c_new - p, p - c_new)
    e = jnp.exp(z)

    s_neg_ref[...] = s_neg_ref[...] * jnp.exp(dc) + jnp.sum(
        jnp.where(nz_mask, e, 0.0), axis=1, keepdims=True)
    s_pos_ref[...] = s_pos_ref[...] * jnp.exp(-dc) + jnp.sum(
        jnp.where(zero_mask, e, 0.0), axis=1, keepdims=True)
    sum_l_ref[...] = sum_l_ref[...] + jnp.sum(
        jnp.where(valid_lane, l, 0.0), axis=1, keepdims=True)
    d = p - l
    mse_ref[...] = mse_ref[...] + jnp.sum(
        jnp.where(valid_lane, d * d, 0.0), axis=1, keepdims=True)
    hi_ref[...] = hi_new
    lo_ref[...] = lo_new

    @pl.when(n == num_n - 1)
    def _finalize():
        c = 0.5 * (hi_ref[...] + lo_ref[...])
        s_neg = s_neg_ref[...]
        s_pos = s_pos_ref[...]
        # Truncating cast, matching `int(torch.sum(label[i]))` in the reference module.
        n_one = sum_l_ref[...].astype(jnp.int32).astype(jnp.float32)
        n_zero = jnp.float32(n_cols) - n_one
        safe_one = jnp.where(n_one > 0.0, n_one, 1.0)
        safe_zero = jnp.where(n_zero > 0.0, n_zero, 1.0)

        # Degenerate branches re-apply exp(+/-c); pair branch: shift cancels exactly.
        loss_all_zero = jnp.exp(c - 1.0) * s_pos / safe_zero   # n_one == 0
        loss_all_one = jnp.exp(-c) * s_neg / safe_one          # n_zero == 0
        loss_pair = (s_neg * s_pos) / (safe_one * safe_zero)   # mixed

        corr = jnp.where(n_one == 0.0, loss_all_zero,
                         jnp.where(n_zero == 0.0, loss_all_one, loss_pair))
        row_total = corr + mse_ref[...] * (1.0 / (batch * n_cols))   # (TB, 1)

        # Zero out padded batch rows; emit a lane-dense (TB, 128) per-row partial.
        row_ids = b * TB + lax.broadcasted_iota(jnp.int32, (TB, 128), 0)
        out_ref[...] = jnp.where(row_ids < batch,
                                 jnp.broadcast_to(row_total, (TB, 128)),
                                 0.0)


def correlation_mse_loss(pred, label, *, block_b=None, block_n=None):
    """pred, label: (B, N) arrays (any float/int dtype). Returns scalar f32 loss."""
    pred = jnp.asarray(pred)
    label = jnp.asarray(label)
    assert pred.shape == label.shape and pred.ndim == 2
    B, N = pred.shape
    in_bytes = pred.dtype.itemsize + label.dtype.itemsize

    # Generation-aware VMEM budget (v7x: 64 MiB physical -> ~32 MiB scoped;
    # v5e/v6e: 128 MiB physical -> request 64 MiB scoped).
    try:
        vmem_cap = int(pltpu.get_tpu_info().vmem_capacity_bytes)
    except Exception:
        vmem_cap = 64 << 20
    vmem_limit = min(vmem_cap // 2, 64 << 20)
    buf_budget = int(vmem_limit * 0.7)   # budget for 2 inputs x 2 pipeline buffers

    n128 = _round_up(N, 128)
    if block_n is None:
        TN = min(n128, 4096)
    else:
        TN = min(_round_up(block_n, 128), n128)
    if block_b is None:
        tb_max = buf_budget // (2 * TN * in_bytes)      # 2x double-buffered inputs
        TB = max(8, min(_round_up(B, 8), (tb_max // 8) * 8, 1024))
    else:
        TB = min(_round_up(block_b, 8), _round_up(B, 8))

    B_pad = _round_up(B, TB)
    N_pad = _round_up(N, TN)
    if (B_pad, N_pad) != (B, N):
        pred = jnp.pad(pred, ((0, B_pad - B), (0, N_pad - N)))
        label = jnp.pad(label, ((0, B_pad - B), (0, N_pad - N)))

    grid = (B_pad // TB, N_pad // TN)
    kernel = functools.partial(_corr_mse_kernel, batch=B, n_cols=N)

    cost = pl.CostEstimate(
        flops=12 * B_pad * N_pad,
        transcendentals=B_pad * N_pad + 8 * B_pad,
        bytes_accessed=B_pad * N_pad * in_bytes + B_pad * 128 * 4,
    )

    out = pl.pallas_call(
        kernel,
        out_shape=jax.ShapeDtypeStruct((B_pad, 128), jnp.float32),
        grid_spec=pltpu.PrefetchScalarGridSpec(
            num_scalar_prefetch=0,
            grid=grid,
            in_specs=[
                pl.BlockSpec((TB, TN), lambda b, n: (b, n)),
                pl.BlockSpec((TB, TN), lambda b, n: (b, n)),
            ],
            out_specs=pl.BlockSpec((TB, 128), lambda b, n: (b, 0)),
            scratch_shapes=[pltpu.VMEM((TB, 1), jnp.float32)] * 6,
        ),
        compiler_params=pltpu.CompilerParams(
            dimension_semantics=("parallel", "arbitrary"),
            vmem_limit_bytes=vmem_limit,
        ),
        cost_estimate=cost,
    )(pred, label)
    return jnp.sum(out[:, 0])


def _reference(pred, label):
    """Pure-JAX reference mirroring the PyTorch loops (pairwise sum kept explicit)."""
    pred = jnp.asarray(pred, jnp.float32)
    label = jnp.asarray(label, jnp.float32)
    B, N = pred.shape
    mse = jnp.mean((pred - label) ** 2)
    total = jnp.float32(0.0)
    for i in range(B):
        pi, li = pred[i], label[i]
        n_one = int(jnp.sum(li))
        n_zero = N - n_one
        zero_m = li == 0
        nz_m = li > 0
        if n_one == 0:
            loss = jnp.sum(jnp.where(zero_m, jnp.exp(pi - 1.0), 0.0)) / n_zero
        elif n_zero == 0:
            loss = jnp.sum(jnp.where(nz_m, jnp.exp(-pi), 0.0)) / n_one
        else:
            pair = jnp.exp(-(pi[:, None] - pi[None, :]))       # exp(-(p_k - p_l))
            mask = nz_m[:, None] & zero_m[None, :]
            loss = jnp.sum(jnp.where(mask, pair, 0.0)) / (n_one * n_zero)
        total = total + loss
    return mse + total


if __name__ == "__main__":
    key = jax.random.PRNGKey(0)
    k1, k2, k3 = jax.random.split(key, 3)

    # Small but multi-tile shape: B=5 rows (pads to 8), N=300 cols (3 lane tiles of 128).
    B, N = 5, 300
    pred = jax.random.normal(k1, (B, N), dtype=jnp.float32)
    label = (jax.random.uniform(k2, (B, N)) < 0.3).astype(jnp.float32)
    label = label.at[1].set(0.0)   # all-zero-label row  -> n_one == 0 branch
    label = label.at[2].set(1.0)   # all-one-label row   -> n_zero == 0 branch

    # (1) multi-N-tile path (exercises the carried partials + shift rescaling)
    out = jax.block_until_ready(correlation_mse_loss(pred, label, block_b=8, block_n=128))
    ref = _reference(pred, label)
    assert bool(jnp.isfinite(out)), out
    assert jnp.allclose(out, ref, rtol=1e-4, atol=1e-5), (out, ref)

    # (2) numerical-stability path: scores ~ +100 would overflow the unshifted
    #     exp(p)*exp(-p) factorization; the per-row shift keeps it finite.
    label_big = (jax.random.uniform(k3, (B, N)) < 0.5).astype(jnp.float32)
    label_big = label_big.at[:, 0].set(1.0).at[:, 1].set(0.0)   # force mixed rows
    pred_big = pred + 100.0
    out_big = jax.block_until_ready(correlation_mse_loss(pred_big, label_big))
    ref_big = _reference(pred_big, label_big)
    assert bool(jnp.isfinite(out_big)), out_big
    assert jnp.allclose(out_big, ref_big, rtol=1e-4), (out_big, ref_big)

    # (3) narrow-dtype path: bf16 inputs passed straight through (no wrapper up-cast).
    out_bf16 = jax.block_until_ready(
        correlation_mse_loss(pred.astype(jnp.bfloat16), label.astype(jnp.bfloat16)))
    ref_bf16 = _reference(pred.astype(jnp.bfloat16).astype(jnp.float32),
                          label.astype(jnp.bfloat16).astype(jnp.float32))
    assert jnp.allclose(out_bf16, ref_bf16, rtol=1e-3, atol=1e-3), (out_bf16, ref_bf16)

    print("KERNEL_OK")
</pallas_src>

<mosaic_0001>
module attributes {stable_mosaic.version = 11 : i64} {
  func.func @_corr_mse_kernel(%arg0: i32, %arg1: i32, %arg2: memref<8x128xf32, #tpu.memory_space<vmem>>, %arg3: memref<8x128xf32, #tpu.memory_space<vmem>>, %arg4: memref<8x128xf32, #tpu.memory_space<vmem>>, %arg5: memref<8x1xf32, #tpu.memory_space<vmem>>, %arg6: memref<8x1xf32, #tpu.memory_space<vmem>>, %arg7: memref<8x1xf32, #tpu.memory_space<vmem>>, %arg8: memref<8x1xf32, #tpu.memory_space<vmem>>, %arg9: memref<8x1xf32, #tpu.memory_space<vmem>>, %arg10: memref<8x1xf32, #tpu.memory_space<vmem>>) attributes {dimension_semantics = [#tpu.dimension_semantics<parallel>, #tpu.dimension_semantics<arbitrary>], iteration_bounds = array<i64: 1, 3>, scalar_prefetch = 0 : i64, scratch_operands = 6 : i64, tpu.core_type = #tpu.core_type<tc>, window_params = [{transform_indices = @transform_0, window_bounds = array<i64: 8, 128>}, {transform_indices = @transform_1, window_bounds = array<i64: 8, 128>}, {transform_indices = @transform_2, window_bounds = array<i64: 8, 128>}]} {
    %c0 = arith.constant 0 : index
    %c0_0 = arith.constant 0 : index
    %0 = vector.load %arg2[%c0, %c0_0] : memref<8x128xf32, #tpu.memory_space<vmem>>, vector<8x128xf32>
    %c0_1 = arith.constant 0 : index
    %c0_2 = arith.constant 0 : index
    %1 = vector.load %arg3[%c0_1, %c0_2] : memref<8x128xf32, #tpu.memory_space<vmem>>, vector<8x128xf32>
    %c128_i32 = arith.constant 128 : i32
    %2 = arith.muli %arg1, %c128_i32 : i32
    %3 = tpu.iota {dimensions = array<i32: 1>} : vector<8x128xi32>
    %4 = vector.broadcast %2 : i32 to vector<8x128xi32>
    %5 = arith.addi %4, %3 : vector<8x128xi32>
    %c300_i32 = arith.constant 300 : i32
    %6 = vector.broadcast %c300_i32 : i32 to vector<8x128xi32>
    %7 = arith.cmpi slt, %5, %6 : vector<8x128xi32>
    %cst = arith.constant 0.000000e+00 : f32
    %8 = vector.broadcast %cst : f32 to vector<8x128xf32>
    %9 = arith.cmpf ogt, %1, %8 : vector<8x128xf32>
    %cst_3 = arith.constant 0.000000e+00 : f32
    %10 = vector.broadcast %cst_3 : f32 to vector<8x128xf32>
    %11 = arith.cmpf oeq, %1, %10 : vector<8x128xf32>
    %12 = arith.andi %11, %7 : vector<8x128xi1>
    %cst_4 = arith.constant 0.000000e+00 : f32
    %cst_5 = arith.constant 1.000000e+30 : f32
    %13 = arith.subf %cst_4, %cst_5 : f32
    %14 = vector.broadcast %13 : f32 to vector<8x128xf32>
    %15 = arith.select %7, %0, %14 : vector<8x128xi1>, vector<8x128xf32>
    %cst_6 = arith.constant dense<0xFF800000> : vector<8xf32>
    %16 = vector.multi_reduction <maximumf>, %15, %cst_6 [1] : vector<8x128xf32> to vector<8xf32>
    %17 = vector.shape_cast %16 : vector<8xf32> to vector<8x1xf32>
    %cst_7 = arith.constant 1.000000e+30 : f32
    %18 = vector.broadcast %cst_7 : f32 to vector<8x128xf32>
    %19 = arith.select %7, %0, %18 : vector<8x128xi1>, vector<8x128xf32>
    %cst_8 = arith.constant dense<0x7F800000> : vector<8xf32>
    %20 = vector.multi_reduction <minimumf>, %19, %cst_8 [1] : vector<8x128xf32> to vector<8xf32>
    %21 = vector.shape_cast %20 : vector<8xf32> to vector<8x1xf32>
    %c0_i32 = arith.constant 0 : i32
    %22 = arith.cmpi eq, %arg1, %c0_i32 : i32
    %23 = arith.extui %22 : i1 to i32
    %c0_i32_9 = arith.constant 0 : i32
    %24 = arith.cmpi ne, %23, %c0_i32_9 : i32
    scf.if %24 {
      %cst_46 = arith.constant 0.000000e+00 : f32
      %83 = vector.broadcast %cst_46 : f32 to vector<8x1xf32>
      %c0_47 = arith.constant 0 : index
      %c0_48 = arith.constant 0 : index
      %84 = vector.load %arg5[%c0_47, %c0_48] : memref<8x1xf32, #tpu.memory_space<vmem>>, vector<8x1xf32>
      tpu.vector_store %arg5[%c0_47, %c0_48], %83 {strides = array<i32>} : memref<8x1xf32, #tpu.memory_space<vmem>>, vector<8x1xf32>,
      %cst_49 = arith.constant 0.000000e+00 : f32
      %85 = vector.broadcast %cst_49 : f32 to vector<8x1xf32>
      %c0_50 = arith.constant 0 : index
      %c0_51 = arith.constant 0 : index
      %86 = vector.load %arg6[%c0_50, %c0_51] : memref<8x1xf32, #tpu.memory_space<vmem>>, vector<8x1xf32>
      tpu.vector_store %arg6[%c0_50, %c0_51], %85 {strides = array<i32>} : memref<8x1xf32, #tpu.memory_space<vmem>>, vector<8x1xf32>,
      %cst_52 = arith.constant 0.000000e+00 : f32
      %87 = vector.broadcast %cst_52 : f32 to vector<8x1xf32>
      %c0_53 = arith.constant 0 : index
      %c0_54 = arith.constant 0 : index
      %88 = vector.load %arg7[%c0_53, %c0_54] : memref<8x1xf32, #tpu.memory_space<vmem>>, vector<8x1xf32>
      tpu.vector_store %arg7[%c0_53, %c0_54], %87 {strides = array<i32>} : memref<8x1xf32, #tpu.memory_space<vmem>>, vector<8x1xf32>,
      %cst_55 = arith.constant 0.000000e+00 : f32
      %89 = vector.broadcast %cst_55 : f32 to vector<8x1xf32>
      %c0_56 = arith.constant 0 : index
      %c0_57 = arith.constant 0 : index
      %90 = vector.load %arg8[%c0_56, %c0_57] : memref<8x1xf32, #tpu.memory_space<vmem>>, vector<8x1xf32>
      tpu.vector_store %arg8[%c0_56, %c0_57], %89 {strides = array<i32>} : memref<8x1xf32, #tpu.memory_space<vmem>>, vector<8x1xf32>,
      %c0_58 = arith.constant 0 : index
      %c0_59 = arith.constant 0 : index
      %91 = vector.load %arg9[%c0_58, %c0_59] : memref<8x1xf32, #tpu.memory_space<vmem>>, vector<8x1xf32>
      tpu.vector_store %arg9[%c0_58, %c0_59], %17 {strides = array<i32>} : memref<8x1xf32, #tpu.memory_space<vmem>>, vector<8x1xf32>,
      %c0_60 = arith.constant 0 : index
      %c0_61 = arith.constant 0 : index
      %92 = vector.load %arg10[%c0_60, %c0_61] : memref<8x1xf32, #tpu.memory_space<vmem>>, vector<8x1xf32>
      tpu.vector_store %arg10[%c0_60, %c0_61], %21 {strides = array<i32>} : memref<8x1xf32, #tpu.memory_space<vmem>>, vector<8x1xf32>,
    } else {
    }
    %c0_10 = arith.constant 0 : index
    %c0_11 = arith.constant 0 : index
    %25 = vector.load %arg9[%c0_10, %c0_11] : memref<8x1xf32, #tpu.memory_space<vmem>>, vector<8x1xf32>
    %c0_12 = arith.constant 0 : index
    %c0_13 = arith.constant 0 : index
    %26 = vector.load %arg10[%c0_12, %c0_13] : memref<8x1xf32, #tpu.memory_space<vmem>>, vector<8x1xf32>
    %27 = arith.addf %25, %26 : vector<8x1xf32>
    %cst_14 = arith.constant 5.000000e-01 : f32
    %28 = vector.broadcast %cst_14 : f32 to vector<8x1xf32>
    %29 = arith.mulf %28, %27 : vector<8x1xf32>
    %30 = arith.maximumf %25, %17 : vector<8x1xf32>
    %31 = arith.minimumf %26, %21 : vector<8x1xf32>
    %32 = arith.addf %30, %31 : vector<8x1xf32>
    %cst_15 = arith.constant 5.000000e-01 : f32
    %33 = vector.broadcast %cst_15 : f32 to vector<8x1xf32>
    %34 = arith.mulf %33, %32 : vector<8x1xf32>
    %35 = arith.subf %34, %29 : vector<8x1xf32>
    %36 = vector.broadcast %34 : vector<8x1xf32> to vector<8x128xf32>
    %37 = arith.subf %36, %0 : vector<8x128xf32>
    %38 = vector.broadcast %34 : vector<8x1xf32> to vector<8x128xf32>
    %39 = arith.subf %0, %38 : vector<8x128xf32>
    %40 = arith.select %9, %37, %39 : vector<8x128xi1>, vector<8x128xf32>
    %41 = math.exp %40 : vector<8x128xf32>
    %c0_16 = arith.constant 0 : index
    %c0_17 = arith.constant 0 : index
    %42 = vector.load %arg5[%c0_16, %c0_17] : memref<8x1xf32, #tpu.memory_space<vmem>>, vector<8x1xf32>
    %43 = math.exp %35 : vector<8x1xf32>
    %44 = arith.mulf %42, %43 : vector<8x1xf32>
    %cst_18 = arith.constant 0.000000e+00 : f32
    %45 = vector.broadcast %cst_18 : f32 to vector<8x128xf32>
    %46 = arith.select %9, %41, %45 : vector<8x128xi1>, vector<8x128xf32>
    %cst_19 = arith.constant dense<0.000000e+00> : vector<8xf32>
    %47 = vector.multi_reduction <add>, %46, %cst_19 [1] : vector<8x128xf32> to vector<8xf32>
    %48 = vector.shape_cast %47 : vector<8xf32> to vector<8x1xf32>
    %49 = arith.addf %44, %48 : vector<8x1xf32>
    %c0_20 = arith.constant 0 : index
    %c0_21 = arith.constant 0 : index
    %50 = vector.load %arg5[%c0_20, %c0_21] : memref<8x1xf32, #tpu.memory_space<vmem>>, vector<8x1xf32>
    tpu.vector_store %arg5[%c0_20, %c0_21], %49 {strides = array<i32>} : memref<8x1xf32, #tpu.memory_space<vmem>>, vector<8x1xf32>,
    %c0_22 = arith.constant 0 : index
    %c0_23 = arith.constant 0 : index
    %51 = vector.load %arg6[%c0_22, %c0_23] : memref<8x1xf32, #tpu.memory_space<vmem>>, vector<8x1xf32>
    %cst_24 = arith.constant 0.000000e+00 : f32
    %52 = vector.broadcast %cst_24 : f32 to vector<8x1xf32>
    %53 = arith.subf %52, %35 : vector<8x1xf32>
    %54 = math.exp %53 : vector<8x1xf32>
    %55 = arith.mulf %51, %54 : vector<8x1xf32>
    %cst_25 = arith.constant 0.000000e+00 : f32
    %56 = vector.broadcast %cst_25 : f32 to vector<8x128xf32>
    %57 = arith.select %12, %41, %56 : vector<8x128xi1>, vector<8x128xf32>
    %cst_26 = arith.constant dense<0.000000e+00> : vector<8xf32>
    %58 = vector.multi_reduction <add>, %57, %cst_26 [1] : vector<8x128xf32> to vector<8xf32>
    %59 = vector.shape_cast %58 : vector<8xf32> to vector<8x1xf32>
    %60 = arith.addf %55, %59 : vector<8x1xf32>
    %c0_27 = arith.constant 0 : index
    %c0_28 = arith.constant 0 : index
    %61 = vector.load %arg6[%c0_27, %c0_28] : memref<8x1xf32, #tpu.memory_space<vmem>>, vector<8x1xf32>
    tpu.vector_store %arg6[%c0_27, %c0_28], %60 {strides = array<i32>} : memref<8x1xf32, #tpu.memory_space<vmem>>, vector<8x1xf32>,
    %c0_29 = arith.constant 0 : index
    %c0_30 = arith.constant 0 : index
    %62 = vector.load %arg7[%c0_29, %c0_30] : memref<8x1xf32, #tpu.memory_space<vmem>>, vector<8x1xf32>
    %cst_31 = arith.constant 0.000000e+00 : f32
    %63 = vector.broadcast %cst_31 : f32 to vector<8x128xf32>
    %64 = arith.select %7, %1, %63 : vector<8x128xi1>, vector<8x128xf32>
    %cst_32 = arith.constant dense<0.000000e+00> : vector<8xf32>
    %65 = vector.multi_reduction <add>, %64, %cst_32 [1] : vector<8x128xf32> to vector<8xf32>
    %66 = vector.shape_cast %65 : vector<8xf32> to vector<8x1xf32>
    %67 = arith.addf %62, %66 : vector<8x1xf32>
    %c0_33 = arith.constant 0 : index
    %c0_34 = arith.constant 0 : index
    %68 = vector.load %arg7[%c0_33, %c0_34] : memref<8x1xf32, #tpu.memory_space<vmem>>, vector<8x1xf32>
    tpu.vector_store %arg7[%c0_33, %c0_34], %67 {strides = array<i32>} : memref<8x1xf32, #tpu.memory_space<vmem>>, vector<8x1xf32>,
    %69 = arith.subf %0, %1 : vector<8x128xf32>
    %c0_35 = arith.constant 0 : index
    %c0_36 = arith.constant 0 : index
    %70 = vector.load %arg8[%c0_35, %c0_36] : memref<8x1xf32, #tpu.memory_space<vmem>>, vector<8x1xf32>
    %71 = arith.mulf %69, %69 : vector<8x128xf32>
    %cst_37 = arith.constant 0.000000e+00 : f32
    %72 = vector.broadcast %cst_37 : f32 to vector<8x128xf32>
    %73 = arith.select %7, %71, %72 : vector<8x128xi1>, vector<8x128xf32>
    %cst_38 = arith.constant dense<0.000000e+00> : vector<8xf32>
    %74 = vector.multi_reduction <add>, %73, %cst_38 [1] : vector<8x128xf32> to vector<8xf32>
    %75 = vector.shape_cast %74 : vector<8xf32> to vector<8x1xf32>
    %76 = arith.addf %70, %75 : vector<8x1xf32>
    %c0_39 = arith.constant 0 : index
    %c0_40 = arith.constant 0 : index
    %77 = vector.load %arg8[%c0_39, %c0_40] : memref<8x1xf32, #tpu.memory_space<vmem>>, vector<8x1xf32>
    tpu.vector_store %arg8[%c0_39, %c0_40], %76 {strides = array<i32>} : memref<8x1xf32, #tpu.memory_space<vmem>>, vector<8x1xf32>,
    %c0_41 = arith.constant 0 : index
    %c0_42 = arith.constant 0 : index
    %78 = vector.load %arg9[%c0_41, %c0_42] : memref<8x1xf32, #tpu.memory_space<vmem>>, vector<8x1xf32>
    tpu.vector_store %arg9[%c0_41, %c0_42], %30 {strides = array<i32>} : memref<8x1xf32, #tpu.memory_space<vmem>>, vector<8x1xf32>,
    %c0_43 = arith.constant 0 : index
    %c0_44 = arith.constant 0 : index
    %79 = vector.load %arg10[%c0_43, %c0_44] : memref<8x1xf32, #tpu.memory_space<vmem>>, vector<8x1xf32>
    tpu.vector_store %arg10[%c0_43, %c0_44], %31 {strides = array<i32>} : memref<8x1xf32, #tpu.memory_space<vmem>>, vector<8x1xf32>,
    %c2_i32 = arith.constant 2 : i32
    %80 = arith.cmpi eq, %arg1, %c2_i32 : i32
    %81 = arith.extui %80 : i1 to i32
    %c0_i32_45 = arith.constant 0 : i32
    %82 = arith.cmpi ne, %81, %c0_i32_45 : i32
    scf.if %82 {
      %c0_46 = arith.constant 0 : index
      %c0_47 = arith.constant 0 : index
      %83 = vector.load %arg9[%c0_46, %c0_47] : memref<8x1xf32, #tpu.memory_space<vmem>>, vector<8x1xf32>
      %c0_48 = arith.constant 0 : index
      %c0_49 = arith.constant 0 : index
      %84 = vector.load %arg10[%c0_48, %c0_49] : memref<8x1xf32, #tpu.memory_space<vmem>>, vector<8x1xf32>
      %85 = arith.addf %83, %84 : vector<8x1xf32>
      %cst_50 = arith.constant 5.000000e-01 : f32
      %86 = vector.broadcast %cst_50 : f32 to vector<8x1xf32>
      %87 = arith.mulf %86, %85 : vector<8x1xf32>
      %c0_51 = arith.constant 0 : index
      %c0_52 = arith.constant 0 : index
      %88 = vector.load %arg5[%c0_51, %c0_52] : memref<8x1xf32, #tpu.memory_space<vmem>>, vector<8x1xf32>
      %c0_53 = arith.constant 0 : index
      %c0_54 = arith.constant 0 : index
      %89 = vector.load %arg6[%c0_53, %c0_54] : memref<8x1xf32, #tpu.memory_space<vmem>>, vector<8x1xf32>
      %c0_55 = arith.constant 0 : index
      %c0_56 = arith.constant 0 : index
      %90 = vector.load %arg7[%c0_55, %c0_56] : memref<8x1xf32, #tpu.memory_space<vmem>>, vector<8x1xf32>
      %91 = arith.fptosi %90 : vector<8x1xf32> to vector<8x1xi32>
      %92 = arith.sitofp %91 : vector<8x1xi32> to vector<8x1xf32>
      %cst_57 = arith.constant 3.000000e+02 : f32
      %93 = vector.broadcast %cst_57 : f32 to vector<8x1xf32>
      %94 = arith.subf %93, %92 : vector<8x1xf32>
      %cst_58 = arith.constant 0.000000e+00 : f32
      %95 = vector.broadcast %cst_58 : f32 to vector<8x1xf32>
      %96 = arith.cmpf ogt, %92, %95 : vector<8x1xf32>
      %cst_59 = arith.constant 1.000000e+00 : f32
      %97 = vector.broadcast %cst_59 : f32 to vector<8x1xf32>
      %98 = arith.select %96, %92, %97 : vector<8x1xi1>, vector<8x1xf32>
      %cst_60 = arith.constant 0.000000e+00 : f32
      %99 = vector.broadcast %cst_60 : f32 to vector<8x1xf32>
      %100 = arith.cmpf ogt, %94, %99 : vector<8x1xf32>
      %cst_61 = arith.constant 1.000000e+00 : f32
      %101 = vector.broadcast %cst_61 : f32 to vector<8x1xf32>
      %102 = arith.select %100, %94, %101 : vector<8x1xi1>, vector<8x1xf32>
      %cst_62 = arith.constant 1.000000e+00 : f32
      %103 = vector.broadcast %cst_62 : f32 to vector<8x1xf32>
      %104 = arith.subf %87, %103 : vector<8x1xf32>
      %105 = math.exp %104 : vector<8x1xf32>
      %106 = arith.mulf %105, %89 : vector<8x1xf32>
      %107 = arith.divf %106, %102 : vector<8x1xf32>
      %cst_63 = arith.constant 0.000000e+00 : f32
      %108 = vector.broadcast %cst_63 : f32 to vector<8x1xf32>
      %109 = arith.subf %108, %87 : vector<8x1xf32>
      %110 = math.exp %109 : vector<8x1xf32>
      %111 = arith.mulf %110, %88 : vector<8x1xf32>
      %112 = arith.divf %111, %98 : vector<8x1xf32>
      %113 = arith.mulf %88, %89 : vector<8x1xf32>
      %114 = arith.mulf %98, %102 : vector<8x1xf32>
      %115 = arith.divf %113, %114 : vector<8x1xf32>
      %cst_64 = arith.constant 0.000000e+00 : f32
      %116 = vector.broadcast %cst_64 : f32 to vector<8x1xf32>
      %117 = arith.cmpf oeq, %92, %116 : vector<8x1xf32>
      %cst_65 = arith.constant 0.000000e+00 : f32
      %118 = vector.broadcast %cst_65 : f32 to vector<8x1xf32>
      %119 = arith.cmpf oeq, %94, %118 : vector<8x1xf32>
      %120 = arith.select %119, %112, %115 : vector<8x1xi1>, vector<8x1xf32>
      %121 = arith.select %117, %107, %120 : vector<8x1xi1>, vector<8x1xf32>
      %c0_66 = arith.constant 0 : index
      %c0_67 = arith.constant 0 : index
      %122 = vector.load %arg8[%c0_66, %c0_67] : memref<8x1xf32, #tpu.memory_space<vmem>>, vector<8x1xf32>
      %cst_68 = arith.constant 6.66666659E-4 : f32
      %123 = vector.broadcast %cst_68 : f32 to vector<8x1xf32>
      %124 = arith.mulf %122, %123 : vector<8x1xf32>
      %125 = arith.addf %121, %124 : vector<8x1xf32>
      %c8_i32 = arith.constant 8 : i32
      %126 = arith.muli %arg0, %c8_i32 : i32
      %127 = tpu.iota {dimensions = array<i32: 0>} : vector<8x128xi32>
      %128 = vector.broadcast %126 : i32 to vector<8x128xi32>
      %129 = arith.addi %128, %127 : vector<8x128xi32>
      %c5_i32 = arith.constant 5 : i32
      %130 = vector.broadcast %c5_i32 : i32 to vector<8x128xi32>
      %131 = arith.cmpi slt, %129, %130 : vector<8x128xi32>
      %132 = vector.shape_cast %125 : vector<8x1xf32> to vector<8x1xf32>
      %133 = vector.broadcast %132 : vector<8x1xf32> to vector<8x128xf32>
      %cst_69 = arith.constant 0.000000e+00 : f32
      %134 = vector.broadcast %cst_69 : f32 to vector<8x128xf32>
      %135 = arith.select %131, %133, %134 : vector<8x128xi1>, vector<8x128xf32>
      %c0_70 = arith.constant 0 : index
      %c0_71 = arith.constant 0 : index
      %136 = vector.load %arg4[%c0_70, %c0_71] : memref<8x128xf32, #tpu.memory_space<vmem>>, vector<8x128xf32>
      tpu.vector_store %arg4[%c0_70, %c0_71], %135 {strides = array<i32>} : memref<8x128xf32, #tpu.memory_space<vmem>>, vector<8x128xf32>,
    } else {
    }
    return
  }
  func.func @transform_0(%arg0: i32, %arg1: i32) -> (i32, i32) {
    %c0_i32 = arith.constant 0 : i32
    return %arg0, %arg1 : i32, i32
  }
  func.func @transform_1(%arg0: i32, %arg1: i32) -> (i32, i32) {
    %c0_i32 = arith.constant 0 : i32
    return %arg0, %arg1 : i32, i32
  }
  func.func @transform_2(%arg0: i32, %arg1: i32) -> (i32, i32) {
    %c0_i32 = arith.constant 0 : i32
    %c0_i32_0 = arith.constant 0 : i32
    return %arg0, %c0_i32 : i32, i32
  }
}

</mosaic_0001>

<llo_original>
// kernel: tpu_custom_call.1
$region0: #{tpu_custom_call.1}
  #allocation0 [shape = 'u32[]', space=smem, size = 0x4, offset = 0x4, fixed_abs, tag = 'smem constant byte address 0x4 - core index']
  #allocation1 [shape = 'u32[144,128]{1,0:T(1,128)}', space=vmem, size = 0x12000, scoped, tag = 'internal scratch']
  #allocation2 [shape = 'f32[8,1]{1,0:T(8,128)}', space=vmem, size = 0x1000, scoped, tag = 'scratch operand']
  #allocation3 [shape = 'f32[8,1]{1,0:T(8,128)}', space=vmem, size = 0x1000, scoped, tag = 'scratch operand']
  #allocation4 [shape = 'f32[8,1]{1,0:T(8,128)}', space=vmem, size = 0x1000, scoped, tag = 'scratch operand']
  #allocation5 [shape = 'f32[8,1]{1,0:T(8,128)}', space=vmem, size = 0x1000, scoped, tag = 'scratch operand']
  #allocation6 [shape = 'f32[8,1]{1,0:T(8,128)}', space=vmem, size = 0x1000, scoped, tag = 'scratch operand']
  #allocation7 [shape = 'f32[8,1]{1,0:T(8,128)}', space=vmem, size = 0x1000, scoped, tag = 'scratch operand']
  %s0 = inlined_call_operand.hbm [shape: f32[8,384], index: 0, kind: input, shape index: {}]
  %s1 = inlined_call_operand.hbm [shape: f32[8,384], index: 1, kind: input, shape index: {}]
  %s2 = inlined_call_operand.hbm [shape: f32[8,128], index: 2, kind: output, shape index: {}]
  %s3 = sld [smem:[#allocation0]]
  $region57: #{tpu_custom_call.1} parent=0
    _
  %s5 = ssub.s32 1, %s3
  %s6 = scalar_select 0, %s5, %s3
  $region1: #{tpu_custom_call.1} parent=0
    #allocation8 [shape = 'u8[8192]{0}', space=vmem, size = 0x2000, scoped, tag = 'input window, operand 0']
    #allocation9 [shape = 's32[2]{0}', space=sflag, size = 0x8, scoped, tag = 'scoped memory for tpu_custom_call.1']
    #allocation10 [shape = 's32[2]{0}', space=sflag, size = 0x8, scoped, tag = 'scoped memory for tpu_custom_call.1']
    #allocation11 [shape = 'u8[8192]{0}', space=vmem, size = 0x2000, scoped, tag = 'input window, operand 1']
    #allocation12 [shape = 's32[2]{0}', space=sflag, size = 0x8, scoped, tag = 'scoped memory for tpu_custom_call.1']
    #allocation13 [shape = 'u8[4096]{0}', space=vmem, size = 0x1000, scoped, tag = 'output window, operand 0, single buffered']
    %7 = vsyncpa [#allocation9], 0
    %s8 = scalar_lea.sflag [#allocation9], 1
    %9 = vsyncpa %s8, 0
    %10 = vsyncpa [#allocation12], 0
    %s11 = scalar_lea.sflag [#allocation12], 1
    %12 = vsyncpa %s11, 0
    %13 = vsyncpa [#allocation10], 0
    loop: start=0, step=1, limit=5
    $region2: #{tpu_custom_call.1} parent=1 // loop_pre_header
      _
    $region3: #{tpu_custom_call.1} parent=1 // loop_header
      %s15 = sphi 0, %s19
      %p16 = scmp.ge.s32.totalorder %s15, 5
      %s22 = sphi 0, %s34
      %s23 = sphi 0, %s30
      %s24 = sphi 0, %s22
      %s25 = sphi 0, %s23
      %s26 = sphi 0, %s24
      %s27 = sphi 0, %s25
      %s39 = sphi 0, %s41
      %s42 = sphi 0, %s39
      %s43 = sphi 0, %s42
      %s59 = sphi 0, %s43
      %s67 = sphi 0, %s69
      %s70 = sphi 0, %s67
      %s71 = sphi 0, %s70
      %s87 = sphi 0, %s71
      %s93 = sphi 0, %s95
      %s96 = sphi 0, %s93
      %s97 = sphi 0, %s96
      %s113 = sphi 0, %s97
    $region4: #{tpu_custom_call.1} parent=1 // loop_header_branch
      %18 = sbr.rel (%p16) target = $region8
    $region5: #{tpu_custom_call.1} parent=1 // loop_body
      %s20 = ssub.s32 %s15, 1
      %s21 = ssub.s32 %s15, 2
      %s28 = sadd.s32 1, %s23
      %p29 = scmp.ge.s32.totalorder %s28, 3
      %s30 = scalar_select %p29, 0, %s28
      %s31 = sadd.s32 1, %s22
      %s32 = scalar_select %p29, %s31, %s22
      %p33 = scmp.ge.s32.totalorder %s32, 1
      %s34 = scalar_select %p33, 0, %s32
      %s35 = ssub.s32 %s22, %s34
      %s36 = ssub.s32 %s23, %s30
      %s37 = sor.u32 %s35, %s36
      %p38 = scmp.eq.s32.totalorder %s37, 0
      %s40 = sadd.s32 %s39, 1
      %s41 = scalar_select %p38, %s39, %s40
      %p44 = pneg %p38
      %p45 = scmp.eq.s32.totalorder %s15, 2
      %p46 = por %p44, %p45
      %p47 = scmp.ne.s32.totalorder %s39, %s42
      %p48 = scmp.eq.s32.totalorder %s15, 0
      %p49 = por %p47, %p48
      %p50 = scmp.ne.s32.totalorder %s39, %s42
      %p51 = scmp.eq.s32.totalorder %s20, 2
      %p52 = por %p50, %p51
      %p53 = scmp.ne.s32.totalorder %s42, %s43
      %p54 = scmp.eq.s32.totalorder %s20, 0
      %p55 = por %p53, %p54
      %p56 = scmp.ne.s32.totalorder %s42, %s43
      %p57 = scmp.eq.s32.totalorder %s21, 2
      %p58 = por %p56, %p57
      %p60 = scmp.ne.s32.totalorder %s43, %s59
      %p61 = scmp.eq.s32.totalorder %s21, 0
      %p62 = por %p60, %p61
      %s63 = ssub.s32 %s22, %s34
      %s64 = ssub.s32 %s23, %s30
      %s65 = sor.u32 %s63, %s64
      %p66 = scmp.eq.s32.totalorder %s65, 0
      %s68 = sadd.s32 %s67, 1
      %s69 = scalar_select %p66, %s67, %s68
      %p72 = pneg %p66
      %p73 = scmp.eq.s32.totalorder %s15, 2
      %p74 = por %p72, %p73
      %p75 = scmp.ne.s32.totalorder %s67, %s70
      %p76 = scmp.eq.s32.totalorder %s15, 0
      %p77 = por %p75, %p76
      %p78 = scmp.ne.s32.totalorder %s67, %s70
      %p79 = scmp.eq.s32.totalorder %s20, 2
      %p80 = por %p78, %p79
      %p81 = scmp.ne.s32.totalorder %s70, %s71
      %p82 = scmp.eq.s32.totalorder %s20, 0
      %p83 = por %p81, %p82
      %p84 = scmp.ne.s32.totalorder %s70, %s71
      %p85 = scmp.eq.s32.totalorder %s21, 2
      %p86 = por %p84, %p85
      %p88 = scmp.ne.s32.totalorder %s71, %s87
      %p89 = scmp.eq.s32.totalorder %s21, 0
      %p90 = por %p88, %p89
      %s91 = ssub.s32 %s22, %s34
      %p92 = scmp.eq.s32.totalorder %s91, 0
      %s94 = sadd.s32 %s93, 1
      %s95 = scalar_select %p92, %s93, %s94
      %p98 = pneg %p92
      %p99 = scmp.eq.s32.totalorder %s15, 2
      %p100 = por %p98, %p99
      %p101 = scmp.ne.s32.totalorder %s93, %s96
      %p102 = scmp.eq.s32.totalorder %s15, 0
      %p103 = por %p101, %p102
      %p104 = scmp.ne.s32.totalorder %s93, %s96
      %p105 = scmp.eq.s32.totalorder %s20, 2
      %p106 = por %p104, %p105
      %p107 = scmp.ne.s32.totalorder %s96, %s97
      %p108 = scmp.eq.s32.totalorder %s20, 0
      %p109 = por %p107, %p108
      %p110 = scmp.ne.s32.totalorder %s96, %s97
      %p111 = scmp.eq.s32.totalorder %s21, 2
      %p112 = por %p110, %p111
      %p114 = scmp.ne.s32.totalorder %s97, %s113
      %p115 = scmp.eq.s32.totalorder %s21, 0
      %p116 = por %p114, %p115
      %p117 = scmp.le.s32.totalorder 1, %s15
      %p118 = scmp.lt.s32.totalorder %s15, 4
      %p119 = pnand %p117, %p118
      %p120 = pneg %p119
      // Predicated region
      $region9: #{tpu_custom_call.1} parent=5 // pred_check
        _
      $region10: #{tpu_custom_call.1} parent=5 // pred_check_branch
        %122 = sbr.rel (%p119) target = $region12
      $region11: #{tpu_custom_call.1} parent=5 // pred_region
        %s123 = ssub.s32 %s15, 1
      $region12: #{tpu_custom_call.1} parent=5 // pred_fallthru
        _
      %p124 = scmp.lt.s32.totalorder %s15, 3
      // Predicated region
      $region13: #{tpu_custom_call.1} parent=5 // pred_check
        %p125 = pneg %p124
      $region14: #{tpu_custom_call.1} parent=5 // pred_check_branch
        %127 = sbr.rel (%p125) target = $region16
      $region15: #{tpu_custom_call.1} parent=5 // pred_region
        // Predicated region
        $region17: #{tpu_custom_call.1} parent=15 // pred_check
          %p128 = pneg %p49
        $region18: #{tpu_custom_call.1} parent=15 // pred_check_branch
          %130 = sbr.rel (%p128) target = $region20
        $region19: #{tpu_custom_call.1} parent=15 // pred_region
          %s131 = sand.u32 %s39, 1
          %s132 = scalar_lea.sflag [#allocation9], %s131
          %s133 = sand.u32 %s39, 1
          %s134 = smul.addr %s133, 8
          %s135 = scalar_lea.vmem [#allocation8], %s134
          %s137 = ssub.s32 128, 128
          %138 = vsyncadd %s132, %s137
          %s139 = smul.addr %s22, 3
          %s140 = sadd.s32 %s23, %s139
          %s141 = smul.addr %s140, 128
          %s142 = scalar_lea.hbm %s0, %s141
          %s144 = sshll.u32 %s135, 4
          %s145 = int_to_ptr.vmem [resolvable:$true] %s144
          %147 = dma.hbm_to_vmem [thread:$0]  %s142, 128, %s145, %s132
        $region20: #{tpu_custom_call.1} parent=15 // pred_fallthru
          _
        // Predicated region
        $region21: #{tpu_custom_call.1} parent=15 // pred_check
          %p148 = pneg %p77
        $region22: #{tpu_custom_call.1} parent=15 // pred_check_branch
          %150 = sbr.rel (%p148) target = $region24
        $region23: #{tpu_custom_call.1} parent=15 // pred_region
          %s151 = sand.u32 %s67, 1
          %s152 = scalar_lea.sflag [#allocation12], %s151
          %s153 = sand.u32 %s67, 1
          %s154 = smul.addr %s153, 8
          %s155 = scalar_lea.vmem [#allocation11], %s154
          %s157 = ssub.s32 128, 128
          %158 = vsyncadd %s152, %s157
          %s159 = smul.addr %s22, 3
          %s160 = sadd.s32 %s23, %s159
          %s161 = smul.addr %s160, 128
          %s162 = scalar_lea.hbm %s1, %s161
          %s164 = sshll.u32 %s155, 4
          %s165 = int_to_ptr.vmem [resolvable:$true] %s164
          %167 = dma.hbm_to_vmem [thread:$0]  %s162, 128, %s165, %s152
        $region24: #{tpu_custom_call.1} parent=15 // pred_fallthru
          _
      $region16: #{tpu_custom_call.1} parent=5 // pred_fallthru
        _
      %p168 = scmp.le.s32.totalorder 1, %s15
      %p169 = scmp.lt.s32.totalorder %s15, 4
      %p170 = pnand %p168, %p169
      %p171 = pneg %p170
      // Predicated region
      $region25: #{tpu_custom_call.1} parent=5 // pred_check
        _
      $region26: #{tpu_custom_call.1} parent=5 // pred_check_branch
        %173 = sbr.rel (%p170) target = $region28
      $region27: #{tpu_custom_call.1} parent=5 // pred_region
        %s174 = ssub.s32 %s15, 1
        %s175 = sand.u32 %s42, 1
        %s176 = scalar_lea.sflag [#allocation9], %s175
        %s177 = sand.u32 %s42, 1
        %s178 = smul.addr %s177, 8
        %s179 = scalar_lea.vmem [#allocation8], %s178
        // Predicated region
        $region29: #{tpu_custom_call.1} parent=27 // pred_check
          %p180 = pneg %p55
        $region30: #{tpu_custom_call.1} parent=27 // pred_check_branch
          %182 = sbr.rel (%p180) target = $region32
        $region31: #{tpu_custom_call.1} parent=27 // pred_region
          %183 = dma.done %s176, 128
        $region32: #{tpu_custom_call.1} parent=27 // pred_fallthru
          _
        %s184 = sand.u32 %s70, 1
        %s185 = scalar_lea.sflag [#allocation12], %s184
        %s186 = sand.u32 %s70, 1
        %s187 = smul.addr %s186, 8
        %s188 = scalar_lea.vmem [#allocation11], %s187
        // Predicated region
        $region33: #{tpu_custom_call.1} parent=27 // pred_check
          %p189 = pneg %p83
        $region34: #{tpu_custom_call.1} parent=27 // pred_check_branch
          %191 = sbr.rel (%p189) target = $region36
        $region35: #{tpu_custom_call.1} parent=27 // pred_region
          %192 = dma.done %s185, 128
        $region36: #{tpu_custom_call.1} parent=27 // pred_fallthru
          _
        %s193 = sand.u32 %s42, 1
        %s194 = scalar_lea.sflag [#allocation9], %s193
        %s195 = sand.u32 %s42, 1
        %s196 = smul.addr %s195, 8
        %s197 = scalar_lea.vmem [#allocation8], %s196
        %p198 = pneg %p55
        %p199 = pneg %p52
        %s200 = sand.u32 %s70, 1
        %s201 = scalar_lea.sflag [#allocation12], %s200
        %s202 = sand.u32 %s70, 1
        %s203 = smul.addr %s202, 8
        %s204 = scalar_lea.vmem [#allocation11], %s203
        %p205 = pneg %p83
        %p206 = pneg %p80
        %p207 = pneg %p109
        %p208 = pneg %p106
        %v209 = vld [vmem:[%s179] sm:$0xff]
        %v210 = vld [vmem:[%s188] sm:$0xff]
        %s211 = smul.u32 %s25, 128
        %v212 = vlaneseq
        %v213 = vand.u32 %v212, 127
        %v214 = vstv %s211
        %v215 = vadd.s32 %v214, %v213
        %vm216 = vcmp.lt.s32.totalorder %v215, 300
        %vm217 = vcmp.gt.f32.partialorder %v210, 0.0
        %vm218 = vcmp.eq.f32.partialorder %v210, 0.0
        %vm219 = vmand %vm218, %vm216
        %v220 = vsel %vm216, %v209, -1e+30
        %221 = vmax.xlane.f32.xlu0 %v220
        %v222 = vpop.xlane.xlu0 %221
        %v223 = vsel %vm216, %v209, 1e+30
        %224 = vmin.xlane.f32.xlu0 %v223
        %v225 = vpop.xlane.xlu0 %224
        %p226 = scmp.eq.s32.totalorder %s25, 0
        // Predicated region
        $region37: #{tpu_custom_call.1} parent=27 // pred_check
          %p227 = pneg %p226
        $region38: #{tpu_custom_call.1} parent=27 // pred_check_branch
          %229 = sbr.rel (%p227) target = $region40
        $region39: #{tpu_custom_call.1} parent=27 // pred_region
          %vm230 = vcmask 7168
          %231 = vst.msk [vmem:[#allocation2] sm:$0xff] %vm230, 0.0
          %232 = vst.msk [vmem:[#allocation3] sm:$0xff] %vm230, 0.0
          %233 = vst.msk [vmem:[#allocation4] sm:$0xff] %vm230, 0.0
          %234 = vst.msk [vmem:[#allocation5] sm:$0xff] %vm230, 0.0
          %235 = vst.msk [vmem:[#allocation6] sm:$0xff] %vm230, %v222
          %236 = vst.msk [vmem:[#allocation7] sm:$0xff] %vm230, %v225
        $region40: #{tpu_custom_call.1} parent=27 // pred_fallthru
          _
        %v237 = vld [vmem:[#allocation6] sm:$0xff]
        %v238 = vld [vmem:[#allocation7] sm:$0xff]
        %v239 = vadd.f32 %v237, %v238
        %v240 = vmul.f32 %v239, 0.5
        %v241 = vmax.f32 %v237, %v222
        %v242 = vmin.f32 %v238, %v225
        %v243 = vadd.f32 %v241, %v242
        %v244 = vmul.f32 %v243, 0.5
        %v245 = vsub.f32 %v244, %v240
        %247 = vset.pattern.permute.xlu0 0
        %248 = vperm.xlu0 %247, %v244
        %v249 = vpop.permute.xlu0 %248
        %v251 = vsub.f32 %v249, %v209
        %v252 = vsub.f32 %v209, %v249
        %v253 = vsel %vm217, %v251, %v252
        %v254 = vmul.f32 %v253, 1.442695
        %v255 = vpow.pop %v254
        %v256 = vld [vmem:[#allocation2] sm:$0xff]
        %v257 = vmul.f32 %v245, 1.442695
        %v258 = vpow.pop %v257
        %v259 = vmul.f32 %v256, %v258
        %v260 = vsel %vm217, %v255, 0.0
        %261 = vadd.xlane.f32.xlu0 %v260
        %v262 = vpop.xlane.xlu0 %261
        %v263 = vadd.f32 %v259, %v262
        %vm264 = vcmask 7168
        %265 = vst.msk [vmem:[#allocation2] sm:$0xff] %vm264, %v263
        %v266 = vld [vmem:[#allocation3] sm:$0xff]
        %v267 = vsub.f32 0.0, %v245
        %v268 = vmul.f32 %v267, 1.442695
        %v269 = vpow.pop %v268
        %v270 = vmul.f32 %v266, %v269
        %v271 = vsel %vm219, %v255, 0.0
        %272 = vadd.xlane.f32.xlu0 %v271
        %v273 = vpop.xlane.xlu0 %272
        %v274 = vadd.f32 %v270, %v273
        %275 = vst.msk [vmem:[#allocation3] sm:$0xff] %vm264, %v274
        %v276 = vld [vmem:[#allocation4] sm:$0xff]
        %v277 = vsel %vm216, %v210, 0.0
        %278 = vadd.xlane.f32.xlu0 %v277
        %v279 = vpop.xlane.xlu0 %278
        %v280 = vadd.f32 %v276, %v279
        %281 = vst.msk [vmem:[#allocation4] sm:$0xff] %vm264, %v280
        %v282 = vsub.f32 %v209, %v210
        %v283 = vld [vmem:[#allocation5] sm:$0xff]
        %v284 = vmul.f32 %v282, %v282
        %v285 = vsel %vm216, %v284, 0.0
        %286 = vadd.xlane.f32.xlu0 %v285
        %v287 = vpop.xlane.xlu0 %286
        %v288 = vadd.f32 %v283, %v287
        %289 = vst.msk [vmem:[#allocation5] sm:$0xff] %vm264, %v288
        %290 = vst.msk [vmem:[#allocation6] sm:$0xff] %vm264, %v241
        %291 = vst.msk [vmem:[#allocation7] sm:$0xff] %vm264, %v242
        %p292 = scmp.eq.s32.totalorder %s25, 2
        // Predicated region
        $region41: #{tpu_custom_call.1} parent=27 // pred_check
          %p293 = pneg %p292
        $region42: #{tpu_custom_call.1} parent=27 // pred_check_branch
          %295 = sbr.rel (%p293) target = $region44
        $region43: #{tpu_custom_call.1} parent=27 // pred_region
          %v296 = vld [vmem:[#allocation6] sm:$0xff]
          %v297 = vld [vmem:[#allocation7] sm:$0xff]
          %v298 = vadd.f32 %v296, %v297
          %v299 = vmul.f32 %v298, 0.5
          %v300 = vld [vmem:[#allocation2] sm:$0xff]
          %v301 = vld [vmem:[#allocation3] sm:$0xff]
          %v302 = vld [vmem:[#allocation4] sm:$0xff]
          %v303 = vcvt.f32.s32.to.zero.pseudo %v302
          %v304 = vcvt.s32.f32 %v303
          %v305 = vsub.f32 300.0, %v304
          %vm306 = vcmp.gt.f32.partialorder %v304, 0.0
          %v307 = vsel %vm306, %v304, 1.0
          %vm308 = vcmp.gt.f32.partialorder %v305, 0.0
          %v309 = vsel %vm308, %v305, 1.0
          %v310 = vsub.f32 %v299, 1.0
          %v311 = vmul.f32 %v310, 1.442695
          %v312 = vpow.pop %v311
          %v313 = vmul.f32 %v312, %v301
          %v314 = vrcp.pop %v309
          %v315 = vmul.f32 %v313, %v314
          %v316 = vsub.f32 0.0, %v299
          %v317 = vmul.f32 %v316, 1.442695
          %v318 = vpow.pop %v317
          %v319 = vmul.f32 %v318, %v300
          %v320 = vrcp.pop %v307
          %v321 = vmul.f32 %v319, %v320
          %v322 = vmul.f32 %v300, %v301
          %v323 = vmul.f32 %v307, %v309
          %v324 = vrcp.pop %v323
          %v325 = vmul.f32 %v322, %v324
          %vm326 = vcmp.eq.f32.partialorder %v304, 0.0
          %vm327 = vcmp.eq.f32.partialorder %v305, 0.0
          %v328 = vsel %vm327, %v321, %v325
          %v329 = vsel %vm326, %v315, %v328
          %v330 = vld [vmem:[#allocation5] sm:$0xff]
          %v331 = vmul.f32 %v330, 0.00066666666
          %v332 = vadd.f32 %v329, %v331
          %s333 = smul.u32 %s24, 8
          %v334 = vlaneseq
          %v335 = vshrl.u32 %v334, 7
          %v336 = vstv %s333
          %v337 = vadd.s32 %v336, %v335
          %vm338 = vcmp.lt.s32.totalorder %v337, 5
          %340 = vset.pattern.permute.xlu0 0
          %341 = vperm.xlu0 %340, %v332
          %v342 = vpop.permute.xlu0 %341
          %v344 = vsel %vm338, %v342, 0.0
          %345 = vst [vmem:[#allocation13] sm:$0xff] %v344
        $region44: #{tpu_custom_call.1} parent=27 // pred_fallthru
          _
        // Predicated region
        $region45: #{tpu_custom_call.1} parent=27 // pred_check
          %p346 = pneg %p106
        $region46: #{tpu_custom_call.1} parent=27 // pred_check_branch
          %348 = sbr.rel (%p346) target = $region48
        $region47: #{tpu_custom_call.1} parent=27 // pred_region
          %s350 = ssub.s32 128, 128
          %351 = vsyncadd [#allocation10], %s350
          %s352 = smul.addr %s24, 128
          %s353 = scalar_lea.hbm %s2, %s352
          %s355 = sshll.u32 [#allocation13], 4
          %s356 = int_to_ptr.vmem [resolvable:$true] %s355
          %358 = dma.vmem_to_hbm [thread:$0]  %s356, 128, %s353, [#allocation10]
        $region48: #{tpu_custom_call.1} parent=27 // pred_fallthru
          _
        // Predicated region
        $region49: #{tpu_custom_call.1} parent=27 // pred_check
          %p359 = pneg %p106
        $region50: #{tpu_custom_call.1} parent=27 // pred_check_branch
          %361 = sbr.rel (%p359) target = $region52
        $region51: #{tpu_custom_call.1} parent=27 // pred_region
          %362 = dma.done [#allocation10], 128
        $region52: #{tpu_custom_call.1} parent=27 // pred_fallthru
          _
      $region28: #{tpu_custom_call.1} parent=5 // pred_fallthru
        _
      %p363 = scmp.le.s32.totalorder 2, %s15
      // Predicated region
      $region53: #{tpu_custom_call.1} parent=5 // pred_check
        %p364 = pneg %p363
      $region54: #{tpu_custom_call.1} parent=5 // pred_check_branch
        %366 = sbr.rel (%p364) target = $region56
      $region55: #{tpu_custom_call.1} parent=5 // pred_region
        %s367 = ssub.s32 %s15, 2
      $region56: #{tpu_custom_call.1} parent=5 // pred_fallthru
        _
    $region6: #{tpu_custom_call.1} parent=1 // loop_footer
      %s19 = sadd.s32 1, %s15
    $region7: #{tpu_custom_call.1} parent=1 // loop_footer_branch
      %14 = sbr.rel target = $region3
    $region8: #{tpu_custom_call.1} parent=1 // loop_exit
      _
    %368 = vsyncpa [#allocation9], 1
    %s369 = scalar_lea.sflag [#allocation9], 1
    %370 = vsyncpa %s369, 1
    %371 = vsyncpa [#allocation12], 1
    %s372 = scalar_lea.sflag [#allocation12], 1
    %373 = vsyncpa %s372, 1
    %374 = vsyncpa [#allocation10], 1
    %s375 = scalar_lea.sflag [#allocation10], 1
    %376 = vsyncpa %s375, 1

</llo_original>
